<compile_context>
chip_gen: v6e
topology: v6e:2x2x1
jax: 0.10.0
libtpu: 0.0.40
codegen_flags: <defaults>
</compile_context>

<pallas_src>
import jax
import jax.numpy as jnp
from jax import lax
from jax.experimental import pallas as pl
from jax.experimental.pallas import tpu as pltpu


def _round_up(x, m):
    return ((x + m - 1) // m) * m


def _pick_tile(dim, max_tile, align):
    """Largest multiple of `align` that divides `dim` and is <= max(max_tile, align).

    `dim` must itself be a multiple of `align`, so `align` always succeeds.
    """
    if dim <= max_tile:
        return dim
    t = (max_tile // align) * align
    while t > align:
        if dim % t == 0:
            return t
        t -= align
    return align


def li_kernel_kfold(x_ref, w_ref, b_ref, alpha_ref, u_ref, out_ref):
    """Whole reduction in one block: no scratch, no branches."""
    current = lax.dot_general(
        x_ref[...], w_ref[...],
        dimension_numbers=(((1,), (1,)), ((), ())),   # contract In with In (NT)
        preferred_element_type=jnp.float32,
    ) + b_ref[...]
    alpha = alpha_ref[...]
    # leaky integration: u_t = alpha*u + (1-alpha)*current  ((1-alpha) on VPU, free)
    out_ref[...] = alpha * u_ref[...] + (1.0 - alpha) * current


def li_kernel_ktiled(x_ref, w_ref, b_ref, alpha_ref, u_ref, out_ref):
    """Fallback for very large In: accumulate into the resident f32 out block."""
    k = pl.program_id(2)

    @pl.when(k == 0)
    def _():
        out_ref[...] = jnp.zeros_like(out_ref)

    out_ref[...] += lax.dot_general(
        x_ref[...], w_ref[...],
        dimension_numbers=(((1,), (1,)), ((), ())),
        preferred_element_type=jnp.float32,
    )

    @pl.when(k == pl.num_programs(2) - 1)
    def _():
        alpha = alpha_ref[...]
        out_ref[...] = alpha * u_ref[...] + (1.0 - alpha) * (out_ref[...] + b_ref[...])


def li_forward(x, weight, bias, alpha, u, *, tm_max=256, tn_max=512, tk_max=2048):
    """x: (B, In), weight: (Out, In), bias/alpha: (Out,), u: (B, Out).

    Returns u_t: (B, Out) in float32.
    """
    B, In = x.shape
    Out, In_w = weight.shape
    assert In_w == In and u.shape == (B, Out)

    f32 = jnp.float32

    # (8, 128)-aligned problem dims; tiles divide them exactly (minimal padding).
    Bp = _round_up(B, 8)
    Np = _round_up(Out, 128)
    Kp = _round_up(In, 128)

    tm = _pick_tile(Bp, tm_max, 8)
    tn = _pick_tile(Np, tn_max, 128)
    # v7x megacore: if the M axis has a single block, keep >=2 blocks along N
    # when possible so both TensorCores get work (neutral on v5e/v6e).
    if Bp // tm == 1 and Np // tn == 1 and Np >= 256:
        tn = _pick_tile(Np, Np // 2, 128)

    # Fold the full reduction into one block when the double-buffered x/W tiles
    # (plus bias/alpha/u/out blocks) comfortably fit scoped VMEM.
    fold_bytes = 4 * (2 * (tm * Kp + tn * Kp + 2 * tn + tm * tn) + 2 * tm * tn)
    fold_k = fold_bytes <= 24 * 1024 * 1024
    tk = Kp if fold_k else _pick_tile(Kp, tk_max, 128)

    # Pad / cast only when actually required (avoids extra HBM passes).
    def to_f32(a):
        return a if a.dtype == f32 else a.astype(f32)

    def pad2(a, r, c):
        pr, pc = r - a.shape[0], c - a.shape[1]
        return jnp.pad(a, ((0, pr), (0, pc))) if (pr or pc) else a

    x_p = pad2(to_f32(x), Bp, Kp)
    w_p = pad2(to_f32(weight), Np, Kp)
    b_p = pad2(to_f32(bias).reshape(1, Out), 1, Np)
    a_p = pad2(to_f32(alpha).reshape(1, Out), 1, Np)
    u_p = pad2(to_f32(u), Bp, Np)

    # Alias u with the output only when u_p is a kernel-private temporary
    # (padding/cast fired), so the caller's state buffer is never clobbered.
    aliases = {4: 0} if (u_p is not u) else {}

    tile_bytes = 4 * (
        2 * (tm * tk + tn * tk + 2 * tn + tm * tn)   # double-buffered inputs
        + 2 * tm * tn                                 # double-buffered output
    )
    vmem_limit = min(max(2 * tile_bytes, 32 * 1024 * 1024), 64 * 1024 * 1024)

    cost = pl.CostEstimate(
        flops=2 * B * In * Out,
        transcendentals=0,
        bytes_accessed=4 * (B * In + Out * In + 2 * Out + 2 * B * Out),
    )

    if fold_k:
        grid = (Bp // tm, Np // tn)
        kernel = li_kernel_kfold
        in_specs = [
            pl.BlockSpec((tm, tk), lambda i, j: (i, 0)),    # x
            pl.BlockSpec((tn, tk), lambda i, j: (j, 0)),    # W (Out, In)
            pl.BlockSpec((1, tn), lambda i, j: (0, j)),     # bias
            pl.BlockSpec((1, tn), lambda i, j: (0, j)),     # alpha
            pl.BlockSpec((tm, tn), lambda i, j: (i, j)),    # u
        ]
        out_spec = pl.BlockSpec((tm, tn), lambda i, j: (i, j))
        dim_sem = ("parallel", "parallel")
    else:
        grid = (Bp // tm, Np // tn, Kp // tk)
        kernel = li_kernel_ktiled
        in_specs = [
            pl.BlockSpec((tm, tk), lambda i, j, k: (i, k)),   # x
            pl.BlockSpec((tn, tk), lambda i, j, k: (j, k)),   # W (Out, In)
            pl.BlockSpec((1, tn), lambda i, j, k: (0, j)),    # bias
            pl.BlockSpec((1, tn), lambda i, j, k: (0, j)),    # alpha
            pl.BlockSpec((tm, tn), lambda i, j, k: (i, j)),   # u
        ]
        out_spec = pl.BlockSpec((tm, tn), lambda i, j, k: (i, j))
        dim_sem = ("parallel", "parallel", "arbitrary")

    u_t_p = pl.pallas_call(
        kernel,
        out_shape=jax.ShapeDtypeStruct((Bp, Np), f32),
        grid_spec=pltpu.PrefetchScalarGridSpec(
            num_scalar_prefetch=0,
            grid=grid,
            in_specs=in_specs,
            out_specs=out_spec,
        ),
        compiler_params=pltpu.CompilerParams(
            dimension_semantics=dim_sem,
            vmem_limit_bytes=vmem_limit,
        ),
        cost_estimate=cost,
        input_output_aliases=aliases,
    )(x_p, w_p, b_p, a_p, u_p)

    if Bp != B or Np != Out:
        return u_t_p[:B, :Out]
    return u_t_p


def init_params(key, in_features, out_features, ff_gain=1.0,
                tau_u_range=(10.0, 20.0), dt=1.0):
    kw, kt = jax.random.split(key)
    bound = ff_gain * (1.0 / in_features) ** 0.5
    weight = jax.random.uniform(
        kw, (out_features, in_features), minval=-bound, maxval=bound,
        dtype=jnp.float32)
    bias = jnp.zeros((out_features,), dtype=jnp.float32)
    # tau_u_trainer ('fixed'): tau uniform in range, decay alpha = exp(-dt/tau)
    tau_u = jax.random.uniform(
        kt, (out_features,), minval=tau_u_range[0], maxval=tau_u_range[1],
        dtype=jnp.float32)
    alpha = jnp.exp(-dt / tau_u)
    return weight, bias, alpha


if __name__ == "__main__":
    key = jax.random.PRNGKey(0)
    k_in, k_state, k_param = jax.random.split(key, 3)

    batch = 4
    in_features = 32
    out_features = 32

    weight, bias, alpha = init_params(k_param, in_features, out_features)
    x = jax.random.normal(k_in, (batch, in_features), dtype=jnp.float32)
    u0 = jnp.zeros((batch, out_features), dtype=jnp.float32)  # initial_state

    # pure-JAX reference (computed first; kernel may alias/donate its temp state)
    ref = alpha[None, :] * u0 + (1.0 - alpha[None, :]) * (x @ weight.T + bias)

    u_t = li_forward(x, weight, bias, alpha, u0)
    jax.block_until_ready(u_t)

    assert u_t.shape == ref.shape
    assert jnp.allclose(u_t, ref, atol=1e-5, rtol=1e-5)

    print("KERNEL_OK")
</pallas_src>

<mosaic_0001>
module attributes {stable_mosaic.version = 11 : i64} {
  func.func @li_kernel_kfold(%arg0: i32, %arg1: i32, %arg2: memref<8x128xf32, #tpu.memory_space<vmem>>, %arg3: memref<128x128xf32, #tpu.memory_space<vmem>>, %arg4: memref<1x128xf32, #tpu.memory_space<vmem>>, %arg5: memref<1x128xf32, #tpu.memory_space<vmem>>, %arg6: memref<8x128xf32, #tpu.memory_space<vmem>>, %arg7: memref<8x128xf32, #tpu.memory_space<vmem>>) attributes {dimension_semantics = [#tpu.dimension_semantics<parallel>, #tpu.dimension_semantics<parallel>], iteration_bounds = array<i64: 1, 1>, scalar_prefetch = 0 : i64, scratch_operands = 0 : i64, tpu.core_type = #tpu.core_type<tc>, window_params = [{transform_indices = @transform_0, window_bounds = array<i64: 8, 128>}, {transform_indices = @transform_1, window_bounds = array<i64: 128, 128>}, {transform_indices = @transform_2, window_bounds = array<i64: 1, 128>}, {transform_indices = @transform_3, window_bounds = array<i64: 1, 128>}, {transform_indices = @transform_4, window_bounds = array<i64: 8, 128>}, {transform_indices = @transform_5, window_bounds = array<i64: 8, 128>}]} {
    %c0 = arith.constant 0 : index
    %c0_0 = arith.constant 0 : index
    %0 = vector.load %arg2[%c0, %c0_0] : memref<8x128xf32, #tpu.memory_space<vmem>>, vector<8x128xf32>
    %c0_1 = arith.constant 0 : index
    %c0_2 = arith.constant 0 : index
    %1 = vector.load %arg3[%c0_1, %c0_2] : memref<128x128xf32, #tpu.memory_space<vmem>>, vector<128x128xf32>
    %cst = arith.constant dense<0.000000e+00> : vector<8x128xf32>
    %2 = tpu.matmul %0, %1, %cst {dimension_numbers = #tpu.dot_dimension_numbers<[1], [1], [0], [0], [0, 0, 1, 0], [], []>} : vector<8x128xf32>, vector<128x128xf32>, vector<8x128xf32> -> vector<8x128xf32>
    %c0_3 = arith.constant 0 : index
    %c0_4 = arith.constant 0 : index
    %3 = vector.load %arg4[%c0_3, %c0_4] : memref<1x128xf32, #tpu.memory_space<vmem>>, vector<1x128xf32>
    %4 = vector.broadcast %3 : vector<1x128xf32> to vector<8x128xf32>
    %5 = arith.addf %2, %4 : vector<8x128xf32>
    %c0_5 = arith.constant 0 : index
    %c0_6 = arith.constant 0 : index
    %6 = vector.load %arg5[%c0_5, %c0_6] : memref<1x128xf32, #tpu.memory_space<vmem>>, vector<1x128xf32>
    %c0_7 = arith.constant 0 : index
    %c0_8 = arith.constant 0 : index
    %7 = vector.load %arg6[%c0_7, %c0_8] : memref<8x128xf32, #tpu.memory_space<vmem>>, vector<8x128xf32>
    %8 = vector.broadcast %6 : vector<1x128xf32> to vector<8x128xf32>
    %9 = arith.mulf %8, %7 : vector<8x128xf32>
    %cst_9 = arith.constant 1.000000e+00 : f32
    %10 = vector.broadcast %cst_9 : f32 to vector<1x128xf32>
    %11 = arith.subf %10, %6 : vector<1x128xf32>
    %12 = vector.broadcast %11 : vector<1x128xf32> to vector<8x128xf32>
    %13 = arith.mulf %12, %5 : vector<8x128xf32>
    %14 = arith.addf %9, %13 : vector<8x128xf32>
    %c0_10 = arith.constant 0 : index
    %c0_11 = arith.constant 0 : index
    %15 = vector.load %arg7[%c0_10, %c0_11] : memref<8x128xf32, #tpu.memory_space<vmem>>, vector<8x128xf32>
    tpu.vector_store %arg7[%c0_10, %c0_11], %14 {strides = array<i32>} : memref<8x128xf32, #tpu.memory_space<vmem>>, vector<8x128xf32>,
    return
  }
  func.func @transform_0(%arg0: i32, %arg1: i32) -> (i32, i32) {
    %c0_i32 = arith.constant 0 : i32
    %c0_i32_0 = arith.constant 0 : i32
    return %arg0, %c0_i32 : i32, i32
  }
  func.func @transform_1(%arg0: i32, %arg1: i32) -> (i32, i32) {
    %c0_i32 = arith.constant 0 : i32
    %c0_i32_0 = arith.constant 0 : i32
    return %arg1, %c0_i32 : i32, i32
  }
  func.func @transform_2(%arg0: i32, %arg1: i32) -> (i32, i32) {
    %c0_i32 = arith.constant 0 : i32
    %c0_i32_0 = arith.constant 0 : i32
    return %c0_i32, %arg1 : i32, i32
  }
  func.func @transform_3(%arg0: i32, %arg1: i32) -> (i32, i32) {
    %c0_i32 = arith.constant 0 : i32
    %c0_i32_0 = arith.constant 0 : i32
    return %c0_i32, %arg1 : i32, i32
  }
  func.func @transform_4(%arg0: i32, %arg1: i32) -> (i32, i32) {
    %c0_i32 = arith.constant 0 : i32
    return %arg0, %arg1 : i32, i32
  }
  func.func @transform_5(%arg0: i32, %arg1: i32) -> (i32, i32) {
    %c0_i32 = arith.constant 0 : i32
    return %arg0, %arg1 : i32, i32
  }
}

</mosaic_0001>

<llo_original>
// kernel: tpu_custom_call.1
$region0: #{tpu_custom_call.1}
  #allocation0 [shape = 'u32[]', space=smem, size = 0x4, offset = 0x4, fixed_abs, tag = 'smem constant byte address 0x4 - core index']
  #allocation1 [shape = 'u32[144,128]{1,0:T(1,128)}', space=vmem, size = 0x12000, scoped, tag = 'internal scratch']
  %s0 = inlined_call_operand.vmem [shape: f32[8,128], index: 0, kind: input, shape index: {}]
  %s1 = inlined_call_operand.hbm [shape: f32[128,128], index: 1, kind: input, shape index: {}]
  %s2 = inlined_call_operand.vmem [shape: f32[1,128], index: 2, kind: input, shape index: {}]
  %s3 = inlined_call_operand.vmem [shape: f32[1,128], index: 3, kind: input, shape index: {}]
  %s4 = inlined_call_operand.hbm [shape: f32[8,128], index: 4, kind: input, shape index: {}, may-alias: {4,5}]
  %s5 = inlined_call_operand.hbm [shape: f32[8,128], index: 5, kind: output, shape index: {}, may-alias: {4,5}]
  %s6 = sld [smem:[#allocation0]]
  $region38: #{tpu_custom_call.1} parent=0
    _
  %s8 = ssub.s32 1, %s6
  %s9 = scalar_select 0, %s8, %s6
  $region1: #{tpu_custom_call.1} parent=0
    #allocation2 [shape = 'u8[65536]{0}', space=vmem, size = 0x10000, scoped, tag = 'input window, operand 1, single buffered']
    #allocation3 [shape = 's32[1]{0}', space=sflag, size = 0x4, scoped, tag = 'scoped memory for tpu_custom_call.1']
    #allocation4 [shape = 's32[1]{0}', space=sflag, size = 0x4, scoped, tag = 'scoped memory for tpu_custom_call.1']
    #allocation5 [shape = 'u8[4096]{0}', space=vmem, size = 0x1000, scoped, tag = 'input window, operand 4, single buffered']
    #allocation6 [shape = 's32[1]{0}', space=sflag, size = 0x4, scoped, tag = 'scoped memory for tpu_custom_call.1']
    #allocation7 [shape = 'u8[4096]{0}', space=vmem, size = 0x1000, scoped, tag = 'output window, operand 0, single buffered']
    %10 = vsyncpa [#allocation3], 0
    %11 = vsyncpa [#allocation6], 0
    %12 = vsyncpa [#allocation4], 0
    // Predicated region
    $region2: #{tpu_custom_call.1} parent=1 // pred_check
      _
    $region3: #{tpu_custom_call.1} parent=1 // pred_check_branch
      %14 = sbr.rel (0) target = $region5
    $region4: #{tpu_custom_call.1} parent=1 // pred_region
      _
    $region5: #{tpu_custom_call.1} parent=1 // pred_fallthru
      _
    // Predicated region
    $region6: #{tpu_custom_call.1} parent=1 // pred_check
      _
    $region7: #{tpu_custom_call.1} parent=1 // pred_check_branch
      %16 = sbr.rel (0) target = $region9
    $region8: #{tpu_custom_call.1} parent=1 // pred_region
      %s18 = ssub.s32 2048, 2048
      %19 = vsyncadd [#allocation3], %s18
      %s20 = sshll.u32 [#allocation2], 4
      %s21 = int_to_ptr.vmem [resolvable:$true] %s20
      %26 = dma.hbm_to_vmem [thread:$0]  %s1, 2048, %s21, [#allocation3], 128, 128, 8
    $region9: #{tpu_custom_call.1} parent=1 // pred_fallthru
      _
    // Predicated region
    $region10: #{tpu_custom_call.1} parent=1 // pred_check
      _
    $region11: #{tpu_custom_call.1} parent=1 // pred_check_branch
      %28 = sbr.rel (0) target = $region13
    $region12: #{tpu_custom_call.1} parent=1 // pred_region
      _
    $region13: #{tpu_custom_call.1} parent=1 // pred_fallthru
      _
    // Predicated region
    $region14: #{tpu_custom_call.1} parent=1 // pred_check
      _
    $region15: #{tpu_custom_call.1} parent=1 // pred_check_branch
      %30 = sbr.rel (0) target = $region17
    $region16: #{tpu_custom_call.1} parent=1 // pred_region
      _
    $region17: #{tpu_custom_call.1} parent=1 // pred_fallthru
      _
    // Predicated region
    $region18: #{tpu_custom_call.1} parent=1 // pred_check
      _
    $region19: #{tpu_custom_call.1} parent=1 // pred_check_branch
      %32 = sbr.rel (0) target = $region21
    $region20: #{tpu_custom_call.1} parent=1 // pred_region
      %s34 = ssub.s32 128, 128
      %35 = vsyncadd [#allocation6], %s34
      %s37 = sshll.u32 [#allocation5], 4
      %s38 = int_to_ptr.vmem [resolvable:$true] %s37
      %40 = dma.hbm_to_vmem [thread:$0]  %s4, 128, %s38, [#allocation6]
    $region21: #{tpu_custom_call.1} parent=1 // pred_fallthru
      _
    // Predicated region
    $region22: #{tpu_custom_call.1} parent=1 // pred_check
      _
    $region23: #{tpu_custom_call.1} parent=1 // pred_check_branch
      %42 = sbr.rel (0) target = $region25
    $region24: #{tpu_custom_call.1} parent=1 // pred_region
      %43 = dma.done [#allocation3], 2048
    $region25: #{tpu_custom_call.1} parent=1 // pred_fallthru
      _
    // Predicated region
    $region26: #{tpu_custom_call.1} parent=1 // pred_check
      _
    $region27: #{tpu_custom_call.1} parent=1 // pred_check_branch
      %45 = sbr.rel (0) target = $region29
    $region28: #{tpu_custom_call.1} parent=1 // pred_region
      %46 = dma.done [#allocation6], 128
    $region29: #{tpu_custom_call.1} parent=1 // pred_fallthru
      _
    %v47 = vld [vmem:[%s0] sm:$0xff]
    %v48 = vld [vmem:[#allocation2] sm:$0xff]
    %v49 = vld [vmem:[#allocation2 + $0x8] sm:$0xff]
    %v50 = vld [vmem:[#allocation2 + $0x10] sm:$0xff]
    %v51 = vld [vmem:[#allocation2 + $0x18] sm:$0xff]
    %v52 = vld [vmem:[#allocation2 + $0x20] sm:$0xff]
    %v53 = vld [vmem:[#allocation2 + $0x28] sm:$0xff]
    %v54 = vld [vmem:[#allocation2 + $0x30] sm:$0xff]
    %v55 = vld [vmem:[#allocation2 + $0x38] sm:$0xff]
    %v56 = vld [vmem:[#allocation2 + $0x40] sm:$0xff]
    %v57 = vld [vmem:[#allocation2 + $0x48] sm:$0xff]
    %v58 = vld [vmem:[#allocation2 + $0x50] sm:$0xff]
    %v59 = vld [vmem:[#allocation2 + $0x58] sm:$0xff]
    %v60 = vld [vmem:[#allocation2 + $0x60] sm:$0xff]
    %v61 = vld [vmem:[#allocation2 + $0x68] sm:$0xff]
    %v62 = vld [vmem:[#allocation2 + $0x70] sm:$0xff]
    %v63 = vld [vmem:[#allocation2 + $0x78] sm:$0xff]
    %v64 = vld [vmem:[%s2] sm:$0x1]
    %v66 = vlaneseq
    %v67 = vshrl.u32 %v66, 7
    %v68 = vsub.s32 0, %v67
    %v69 = vrot.slane %v64, %v68
    %71 = vmatprep.subr.mxu0 0.0
    %72 = vmatpush1.xpose.msra.mxu0 %v63
    %73 = vmatprep.subr.mxu0 0.0
    %74 = vmatpush1.xpose.msra.mxu0 %v62
    %75 = vmatprep.subr.mxu0 0.0
    %76 = vmatpush1.xpose.msra.mxu0 %v61
    %77 = vmatprep.subr.mxu0 0.0
    %78 = vmatpush1.xpose.msra.mxu0 %v60
    %79 = vmatprep.subr.mxu0 0.0
    %80 = vmatpush1.xpose.msra.mxu0 %v59
    %81 = vmatprep.subr.mxu0 0.0
    %82 = vmatpush1.xpose.msra.mxu0 %v58
    %83 = vmatprep.subr.mxu0 0.0
    %84 = vmatpush1.xpose.msra.mxu0 %v57
    %85 = vmatprep.subr.mxu0 0.0
    %86 = vmatpush1.xpose.msra.mxu0 %v56
    %87 = vmatprep.subr.mxu0 0.0
    %88 = vmatpush1.xpose.msra.mxu0 %v55
    %89 = vmatprep.subr.mxu0 0.0
    %90 = vmatpush1.xpose.msra.mxu0 %v54
    %91 = vmatprep.subr.mxu0 0.0
    %92 = vmatpush1.xpose.msra.mxu0 %v53
    %93 = vmatprep.subr.mxu0 0.0
    %94 = vmatpush1.xpose.msra.mxu0 %v52
    %95 = vmatprep.subr.mxu0 0.0
    %96 = vmatpush1.xpose.msra.mxu0 %v51
    %97 = vmatprep.subr.mxu0 0.0
    %98 = vmatpush1.xpose.msra.mxu0 %v50
    %99 = vmatprep.subr.mxu0 0.0
    %100 = vmatpush1.xpose.msra.mxu0 %v49
    %101 = vmatprep.subr.mxu0 0.0
    %102 = vmatpush1.xpose.msra.mxu0 %v48
    %103 = vmatprep.subr.mxu0 0.0
    %104 = vmatpush2.xpose.msra.mxu0 0.0
    %105 = vmatprep.subr.mxu0 0.0
    %106 = vmatpush2.xpose.msra.mxu0 0.0
    %107 = vmatprep.subr.mxu0 0.0
    %108 = vmatpush2.xpose.msra.mxu0 0.0
    %109 = vmatprep.subr.mxu0 0.0
    %110 = vmatpush2.xpose.msra.mxu0 0.0
    %111 = vmatprep.subr.mxu0 0.0
    %112 = vmatpush2.xpose.msra.mxu0 0.0
    %113 = vmatprep.subr.mxu0 0.0
    %114 = vmatpush2.xpose.msra.mxu0 0.0
    %115 = vmatprep.subr.mxu0 0.0
    %116 = vmatpush2.xpose.msra.mxu0 0.0
    %117 = vmatprep.subr.mxu0 0.0
    %118 = vmatpush2.xpose.msra.mxu0 0.0
    %119 = vmatprep.subr.mxu0 0.0
    %120 = vmatpush2.xpose.msra.mxu0 0.0
    %121 = vmatprep.subr.mxu0 0.0
    %122 = vmatpush2.xpose.msra.mxu0 0.0
    %123 = vmatprep.subr.mxu0 0.0
    %124 = vmatpush2.xpose.msra.mxu0 0.0
    %125 = vmatprep.subr.mxu0 0.0
    %126 = vmatpush2.xpose.msra.mxu0 0.0
    %127 = vmatprep.subr.mxu0 0.0
    %128 = vmatpush2.xpose.msra.mxu0 0.0
    %129 = vmatprep.subr.mxu0 0.0
    %130 = vmatpush2.xpose.msra.mxu0 0.0
    %131 = vmatprep.subr.mxu0 0.0
    %132 = vmatpush2.xpose.msra.mxu0 0.0
    %133 = vmatprep.subr.mxu0 0.0
    %134 = vmatpush2.xpose.msra.mxu0 0.0
    %135 = vmatprep.mubr.f32.mxu0 0.0
    %136 = vmatmul.mubr.f32.gmra.mxu0 %v47
    %v137 = vpop.f32.mrf.mxu0
    %v138 = vadd.f32 %v69, %v137
    %v139 = vpop.f32.mrf.mxu0
    %140 = vdwg.mxu0
    %v141 = vld [vmem:[%s3] sm:$0x1]
    %v142 = vld [vmem:[#allocation5] sm:$0xff]
    %v144 = vlaneseq
    %v145 = vshrl.u32 %v144, 7
    %v146 = vsub.s32 0, %v145
    %v147 = vrot.slane %v141, %v146
    %v149 = vmul.f32 %v147, %v142
    %v150 = vsub.f32 1.0, %v141
    %v152 = vlaneseq
    %v153 = vshrl.u32 %v152, 7
    %v154 = vsub.s32 0, %v153
    %v155 = vrot.slane %v150, %v154
    %v157 = vmul.f32 %v155, %v138
    %v158 = vadd.f32 %v149, %v157
    %159 = vst [vmem:[#allocation7] sm:$0xff] %v158
    // Predicated region
    $region30: #{tpu_custom_call.1} parent=1 // pred_check
      _
    $region31: #{tpu_custom_call.1} parent=1 // pred_check_branch
      %161 = sbr.rel (0) target = $region33
    $region32: #{tpu_custom_call.1} parent=1 // pred_region
      %s163 = ssub.s32 128, 128
      %164 = vsyncadd [#allocation4], %s163
      %s166 = sshll.u32 [#allocation7], 4
      %s167 = int_to_ptr.vmem [resolvable:$true] %s166
      %169 = dma.vmem_to_hbm [thread:$0]  %s167, 128, %s5, [#allocation4]
    $region33: #{tpu_custom_call.1} parent=1 // pred_fallthru
      _
    // Predicated region
    $region34: #{tpu_custom_call.1} parent=1 // pred_check
      _
    $region35: #{tpu_custom_call.1} parent=1 // pred_check_branch
      %171 = sbr.rel (0) target = $region37
    $region36: #{tpu_custom_call.1} parent=1 // pred_region
      %172 = dma.done [#allocation4], 128
    $region37: #{tpu_custom_call.1} parent=1 // pred_fallthru
      _
    %173 = vsyncpa [#allocation3], 1
    %174 = vsyncpa [#allocation6], 1
    %175 = vsyncpa [#allocation4], 1

</llo_original>
